<compile_context>
chip_gen: v7x
topology: tpu7x:2x2x1
jax: 0.10.0
libtpu: 0.0.40
codegen_flags: <defaults>
</compile_context>

<pallas_src>
import functools

import jax
import jax.numpy as jnp
from jax.experimental import pallas as pl
from jax.experimental.pallas import tpu as pltpu

TEMPERATURE = 0.07
_NEG = -1e30          # finite "minus infinity" for the self-similarity mask


def _row_normalize(x, scale):
    """F.normalize(dim=1) (eps=1e-12) with a folded-in scale, via rsqrt."""
    x = x.astype(jnp.float32)
    ss = jnp.sum(x * x, axis=1, keepdims=True)
    inv = jax.lax.rsqrt(jnp.maximum(ss, 1e-24)) * scale
    return x * inv


def _infonce_kernel(qv_ref, qt_ref, kv_ref, kt_ref, lv_ref, lt_ref,
                    m_v, l_v, m_t, l_t, *, tq, tk, inv_t, mm_dtype):
    r = pl.program_id(0)          # query (row) block over the batch
    c = pl.program_id(1)          # key (column) block over the batch
    nc = pl.num_programs(1)

    @pl.when(c == 0)
    def _init():
        m_v[...] = jnp.full_like(m_v, -jnp.inf)
        m_t[...] = jnp.full_like(m_t, -jnp.inf)
        l_v[...] = jnp.zeros_like(l_v)
        l_t[...] = jnp.zeros_like(l_t)

    # Normalize tiles; 1/temperature is folded into the key tiles so the
    # similarity matrix is never divided/multiplied elementwise.
    qv = _row_normalize(qv_ref[...], 1.0)       # (TQ, Dp) f32
    qt = _row_normalize(qt_ref[...], 1.0)
    kv = _row_normalize(kv_ref[...], inv_t)     # (TK, Dp) f32, 1/T folded in
    kt = _row_normalize(kt_ref[...], inv_t)

    # MXU matmuls: contract the feature axis of both operands directly (no
    # transposed copy); low-precision operands, f32 accumulation.
    dnums = (((1,), (1,)), ((), ()))

    def _sim(q, k):
        return jax.lax.dot_general(q.astype(mm_dtype), k.astype(mm_dtype),
                                   dnums, preferred_element_type=jnp.float32)

    s_vv = _sim(qv, kv)     # (TQ, TK)  vis-query x vis-key
    s_vt = _sim(qv, kt)     # (TQ, TK)  vis-query x txt-key
    s_tv = _sim(qt, kv)     # (TQ, TK)  txt-query x vis-key
    s_tt = _sim(qt, kt)     # (TQ, TK)  txt-query x txt-key

    # Self-similarity (diagonal of the full [2B,2B] matrix) only occurs in the
    # vis-vis and txt-txt tiles; on non-overlapping (r, c) tiles the compare is
    # all-False and the select is a no-op.
    row_g = r * tq + jax.lax.broadcasted_iota(jnp.int32, (tq, tk), 0)
    col_g = c * tk + jax.lax.broadcasted_iota(jnp.int32, (tq, tk), 1)
    diag = row_g == col_g
    s_vv = jnp.where(diag, _NEG, s_vv)
    s_tt = jnp.where(diag, _NEG, s_tt)

    def _online_lse(m_ref, l_ref, sa, sb):
        m_old = m_ref[...]
        m_new = jnp.maximum(m_old,
                            jnp.maximum(jnp.max(sa, axis=1, keepdims=True),
                                        jnp.max(sb, axis=1, keepdims=True)))
        alpha = jnp.exp(m_old - m_new)
        part = (jnp.sum(jnp.exp(sa - m_new), axis=1, keepdims=True) +
                jnp.sum(jnp.exp(sb - m_new), axis=1, keepdims=True))
        l_ref[...] = alpha * l_ref[...] + part
        m_ref[...] = m_new

    _online_lse(m_v, l_v, s_vv, s_vt)     # queries from the visual half
    _online_lse(m_t, l_t, s_tv, s_tt)     # queries from the textual half

    @pl.when(c == nc - 1)
    def _finalize():
        # Positive logit: sim[i, i+B] == sim[i+B, i] == <vis_n[i], txt_n[i]>/T,
        # computed directly in O(TQ*D) instead of masking the full matrix.
        pos = jnp.sum(qv * qt, axis=1, keepdims=True) * inv_t
        lv_ref[...] = m_v[...] + jnp.log(l_v[...]) - pos
        lt_ref[...] = m_t[...] + jnp.log(l_t[...]) - pos


def _pick_tile(n, candidates):
    for t in candidates:
        if t <= n and n % t == 0:
            return t
    return n          # fall back to the full dimension (always a legal block)


def infonce_loss(visual_features, textual_features,
                 temperature=TEMPERATURE, matmul_dtype=jnp.bfloat16):
    B, D = visual_features.shape
    assert textual_features.shape == (B, D)

    # Zero-pad the feature axis to a lane-width multiple (no-op for norms, dot
    # products and therefore the loss).
    Dp = ((D + 127) // 128) * 128
    if Dp != D:
        pad = ((0, 0), (0, Dp - D))
        vis = jnp.pad(visual_features, pad)
        txt = jnp.pad(textual_features, pad)
    else:
        vis, txt = visual_features, textual_features

    # Tile sizes: multiples of 8 dividing B (or the full B). Working set
    # (query + key tiles, four (TQ,TK) f32 sim tiles, double-buffered DMA)
    # stays far below v7x's 64 MiB VMEM while giving full MXU passes.
    tq = _pick_tile(B, (256, 128, 64, 32, 16, 8))
    tk = _pick_tile(B, (512, 256, 128, 64, 32, 16, 8))
    grid = (B // tq, B // tk)     # rows parallel (megacore), cols = reduction

    kernel = functools.partial(_infonce_kernel, tq=tq, tk=tk,
                               inv_t=1.0 / temperature, mm_dtype=matmul_dtype)

    lv, lt = pl.pallas_call(
        kernel,
        out_shape=(jax.ShapeDtypeStruct((B, 1), jnp.float32),
                   jax.ShapeDtypeStruct((B, 1), jnp.float32)),
        grid=grid,
        in_specs=[
            pl.BlockSpec((tq, Dp), lambda r, c: (r, 0)),   # visual query tile
            pl.BlockSpec((tq, Dp), lambda r, c: (r, 0)),   # textual query tile
            pl.BlockSpec((tk, Dp), lambda r, c: (c, 0)),   # visual key tile
            pl.BlockSpec((tk, Dp), lambda r, c: (c, 0)),   # textual key tile
        ],
        out_specs=(pl.BlockSpec((tq, 1), lambda r, c: (r, 0)),
                   pl.BlockSpec((tq, 1), lambda r, c: (r, 0))),
        scratch_shapes=[pltpu.VMEM((tq, 1), jnp.float32)] * 4,
        compiler_params=pltpu.CompilerParams(
            dimension_semantics=("parallel", "arbitrary"),
            vmem_limit_bytes=64 * 1024 * 1024),
    )(vis, txt, vis, txt)

    # Tiny O(2B) reduction left to XLA: per-row losses -> scalar mean.
    return (jnp.sum(lv) + jnp.sum(lt)) / jnp.float32(2 * B)


def _infonce_ref(vis, txt, temperature=TEMPERATURE):
    # Pure-JAX reference of the PyTorch module (verification only).
    x = jnp.concatenate([vis, txt], axis=0)
    x = x / jnp.maximum(jnp.linalg.norm(x, axis=1, keepdims=True), 1e-12)
    sim = (x @ x.T) / temperature
    n = x.shape[0]
    b = n // 2
    mask = jnp.eye(n, dtype=bool)
    sim_off = jnp.where(mask, -jnp.inf, sim)
    lse = jax.nn.logsumexp(sim_off, axis=1)
    pos = sim[jnp.arange(n), (jnp.arange(n) + b) % n]
    return jnp.mean(lse - pos)


if __name__ == "__main__":
    key = jax.random.PRNGKey(0)
    k1, k2 = jax.random.split(key)
    B, D = 8, 32
    visual = jax.random.normal(k1, (B, D), dtype=jnp.float32)
    textual = jax.random.normal(k2, (B, D), dtype=jnp.float32)

    ref = _infonce_ref(visual, textual)

    # Exact path: f32 MXU operands.
    loss_f32 = infonce_loss(visual, textual, matmul_dtype=jnp.float32)
    jax.block_until_ready(loss_f32)
    assert jnp.allclose(loss_f32, ref, rtol=1e-4, atol=1e-4), (loss_f32, ref)

    # Fast (default) path: bf16 MXU operands, f32 accumulation & LSE.
    loss_bf16 = infonce_loss(visual, textual)
    jax.block_until_ready(loss_bf16)
    assert jnp.allclose(loss_bf16, ref, rtol=2e-2, atol=2e-2), (loss_bf16, ref)

    print("KERNEL_OK")
</pallas_src>

<mosaic_0001>
module attributes {stable_mosaic.version = 11 : i64} {
  func.func @_infonce_kernel(%arg0: i32, %arg1: i32, %arg2: memref<8x128xf32, #tpu.memory_space<vmem>>, %arg3: memref<8x128xf32, #tpu.memory_space<vmem>>, %arg4: memref<8x128xf32, #tpu.memory_space<vmem>>, %arg5: memref<8x128xf32, #tpu.memory_space<vmem>>, %arg6: memref<8x1xf32, #tpu.memory_space<vmem>>, %arg7: memref<8x1xf32, #tpu.memory_space<vmem>>, %arg8: memref<8x1xf32, #tpu.memory_space<vmem>>, %arg9: memref<8x1xf32, #tpu.memory_space<vmem>>, %arg10: memref<8x1xf32, #tpu.memory_space<vmem>>, %arg11: memref<8x1xf32, #tpu.memory_space<vmem>>) attributes {dimension_semantics = [#tpu.dimension_semantics<parallel>, #tpu.dimension_semantics<arbitrary>], iteration_bounds = array<i64: 1, 1>, scalar_prefetch = 0 : i64, scratch_operands = 4 : i64, tpu.core_type = #tpu.core_type<tc>, window_params = [{transform_indices = @transform_0, window_bounds = array<i64: 8, 128>}, {transform_indices = @transform_1, window_bounds = array<i64: 8, 128>}, {transform_indices = @transform_2, window_bounds = array<i64: 8, 128>}, {transform_indices = @transform_3, window_bounds = array<i64: 8, 128>}, {transform_indices = @transform_4, window_bounds = array<i64: 8, 1>}, {transform_indices = @transform_5, window_bounds = array<i64: 8, 1>}]} {
    %c0_i32 = arith.constant 0 : i32
    %0 = arith.cmpi eq, %arg1, %c0_i32 : i32
    %1 = arith.extui %0 : i1 to i32
    %c0_i32_0 = arith.constant 0 : i32
    %2 = arith.cmpi ne, %1, %c0_i32_0 : i32
    scf.if %2 {
      %cst_52 = arith.constant 0xFF800000 : f32
      %117 = vector.broadcast %cst_52 : f32 to vector<8x1xf32>
      %c0_53 = arith.constant 0 : index
      %c0_54 = arith.constant 0 : index
      %118 = vector.load %arg8[%c0_53, %c0_54] : memref<8x1xf32, #tpu.memory_space<vmem>>, vector<8x1xf32>
      tpu.vector_store %arg8[%c0_53, %c0_54], %117 {strides = array<i32>} : memref<8x1xf32, #tpu.memory_space<vmem>>, vector<8x1xf32>,
      %cst_55 = arith.constant 0xFF800000 : f32
      %119 = vector.broadcast %cst_55 : f32 to vector<8x1xf32>
      %c0_56 = arith.constant 0 : index
      %c0_57 = arith.constant 0 : index
      %120 = vector.load %arg10[%c0_56, %c0_57] : memref<8x1xf32, #tpu.memory_space<vmem>>, vector<8x1xf32>
      tpu.vector_store %arg10[%c0_56, %c0_57], %119 {strides = array<i32>} : memref<8x1xf32, #tpu.memory_space<vmem>>, vector<8x1xf32>,
      %cst_58 = arith.constant 0.000000e+00 : f32
      %121 = vector.broadcast %cst_58 : f32 to vector<8x1xf32>
      %c0_59 = arith.constant 0 : index
      %c0_60 = arith.constant 0 : index
      %122 = vector.load %arg9[%c0_59, %c0_60] : memref<8x1xf32, #tpu.memory_space<vmem>>, vector<8x1xf32>
      tpu.vector_store %arg9[%c0_59, %c0_60], %121 {strides = array<i32>} : memref<8x1xf32, #tpu.memory_space<vmem>>, vector<8x1xf32>,
      %cst_61 = arith.constant 0.000000e+00 : f32
      %123 = vector.broadcast %cst_61 : f32 to vector<8x1xf32>
      %c0_62 = arith.constant 0 : index
      %c0_63 = arith.constant 0 : index
      %124 = vector.load %arg11[%c0_62, %c0_63] : memref<8x1xf32, #tpu.memory_space<vmem>>, vector<8x1xf32>
      tpu.vector_store %arg11[%c0_62, %c0_63], %123 {strides = array<i32>} : memref<8x1xf32, #tpu.memory_space<vmem>>, vector<8x1xf32>,
    } else {
    }
    %c0 = arith.constant 0 : index
    %c0_1 = arith.constant 0 : index
    %3 = vector.load %arg2[%c0, %c0_1] : memref<8x128xf32, #tpu.memory_space<vmem>>, vector<8x128xf32>
    %4 = arith.mulf %3, %3 : vector<8x128xf32>
    %cst = arith.constant dense<0.000000e+00> : vector<8xf32>
    %5 = vector.multi_reduction <add>, %4, %cst [1] : vector<8x128xf32> to vector<8xf32>
    %6 = vector.shape_cast %5 : vector<8xf32> to vector<8x1xf32>
    %cst_2 = arith.constant 1.000000e-24 : f32
    %7 = vector.broadcast %cst_2 : f32 to vector<8x1xf32>
    %8 = arith.maximumf %6, %7 : vector<8x1xf32>
    %9 = math.rsqrt %8 : vector<8x1xf32>
    %cst_3 = arith.constant 1.000000e+00 : f32
    %10 = vector.broadcast %cst_3 : f32 to vector<8x1xf32>
    %11 = arith.mulf %9, %10 : vector<8x1xf32>
    %12 = vector.broadcast %11 : vector<8x1xf32> to vector<8x128xf32>
    %13 = arith.mulf %3, %12 : vector<8x128xf32>
    %c0_4 = arith.constant 0 : index
    %c0_5 = arith.constant 0 : index
    %14 = vector.load %arg3[%c0_4, %c0_5] : memref<8x128xf32, #tpu.memory_space<vmem>>, vector<8x128xf32>
    %15 = arith.mulf %14, %14 : vector<8x128xf32>
    %cst_6 = arith.constant dense<0.000000e+00> : vector<8xf32>
    %16 = vector.multi_reduction <add>, %15, %cst_6 [1] : vector<8x128xf32> to vector<8xf32>
    %17 = vector.shape_cast %16 : vector<8xf32> to vector<8x1xf32>
    %cst_7 = arith.constant 1.000000e-24 : f32
    %18 = vector.broadcast %cst_7 : f32 to vector<8x1xf32>
    %19 = arith.maximumf %17, %18 : vector<8x1xf32>
    %20 = math.rsqrt %19 : vector<8x1xf32>
    %cst_8 = arith.constant 1.000000e+00 : f32
    %21 = vector.broadcast %cst_8 : f32 to vector<8x1xf32>
    %22 = arith.mulf %20, %21 : vector<8x1xf32>
    %23 = vector.broadcast %22 : vector<8x1xf32> to vector<8x128xf32>
    %24 = arith.mulf %14, %23 : vector<8x128xf32>
    %c0_9 = arith.constant 0 : index
    %c0_10 = arith.constant 0 : index
    %25 = vector.load %arg4[%c0_9, %c0_10] : memref<8x128xf32, #tpu.memory_space<vmem>>, vector<8x128xf32>
    %26 = arith.mulf %25, %25 : vector<8x128xf32>
    %cst_11 = arith.constant dense<0.000000e+00> : vector<8xf32>
    %27 = vector.multi_reduction <add>, %26, %cst_11 [1] : vector<8x128xf32> to vector<8xf32>
    %28 = vector.shape_cast %27 : vector<8xf32> to vector<8x1xf32>
    %cst_12 = arith.constant 1.000000e-24 : f32
    %29 = vector.broadcast %cst_12 : f32 to vector<8x1xf32>
    %30 = arith.maximumf %28, %29 : vector<8x1xf32>
    %31 = math.rsqrt %30 : vector<8x1xf32>
    %cst_13 = arith.constant 14.2857141 : f32
    %32 = vector.broadcast %cst_13 : f32 to vector<8x1xf32>
    %33 = arith.mulf %31, %32 : vector<8x1xf32>
    %34 = vector.broadcast %33 : vector<8x1xf32> to vector<8x128xf32>
    %35 = arith.mulf %25, %34 : vector<8x128xf32>
    %c0_14 = arith.constant 0 : index
    %c0_15 = arith.constant 0 : index
    %36 = vector.load %arg5[%c0_14, %c0_15] : memref<8x128xf32, #tpu.memory_space<vmem>>, vector<8x128xf32>
    %37 = arith.mulf %36, %36 : vector<8x128xf32>
    %cst_16 = arith.constant dense<0.000000e+00> : vector<8xf32>
    %38 = vector.multi_reduction <add>, %37, %cst_16 [1] : vector<8x128xf32> to vector<8xf32>
    %39 = vector.shape_cast %38 : vector<8xf32> to vector<8x1xf32>
    %cst_17 = arith.constant 1.000000e-24 : f32
    %40 = vector.broadcast %cst_17 : f32 to vector<8x1xf32>
    %41 = arith.maximumf %39, %40 : vector<8x1xf32>
    %42 = math.rsqrt %41 : vector<8x1xf32>
    %cst_18 = arith.constant 14.2857141 : f32
    %43 = vector.broadcast %cst_18 : f32 to vector<8x1xf32>
    %44 = arith.mulf %42, %43 : vector<8x1xf32>
    %45 = vector.broadcast %44 : vector<8x1xf32> to vector<8x128xf32>
    %46 = arith.mulf %36, %45 : vector<8x128xf32>
    %cst_19 = arith.constant dense<0.000000e+00> : vector<8x8xf32>
    %47 = tpu.matmul %13, %35, %cst_19 {dimension_numbers = #tpu.dot_dimension_numbers<[1], [1], [0], [0], [0, 0, 1, 0], [], []>} : vector<8x128xf32>, vector<8x128xf32>, vector<8x8xf32> -> vector<8x8xf32>
    %cst_20 = arith.constant dense<0.000000e+00> : vector<8x8xf32>
    %48 = tpu.matmul %13, %46, %cst_20 {dimension_numbers = #tpu.dot_dimension_numbers<[1], [1], [0], [0], [0, 0, 1, 0], [], []>} : vector<8x128xf32>, vector<8x128xf32>, vector<8x8xf32> -> vector<8x8xf32>
    %cst_21 = arith.constant dense<0.000000e+00> : vector<8x8xf32>
    %49 = tpu.matmul %24, %35, %cst_21 {dimension_numbers = #tpu.dot_dimension_numbers<[1], [1], [0], [0], [0, 0, 1, 0], [], []>} : vector<8x128xf32>, vector<8x128xf32>, vector<8x8xf32> -> vector<8x8xf32>
    %cst_22 = arith.constant dense<0.000000e+00> : vector<8x8xf32>
    %50 = tpu.matmul %24, %46, %cst_22 {dimension_numbers = #tpu.dot_dimension_numbers<[1], [1], [0], [0], [0, 0, 1, 0], [], []>} : vector<8x128xf32>, vector<8x128xf32>, vector<8x8xf32> -> vector<8x8xf32>
    %c8_i32 = arith.constant 8 : i32
    %51 = arith.muli %arg0, %c8_i32 : i32
    %52 = tpu.iota {dimensions = array<i32: 0>} : vector<8x8xi32>
    %53 = vector.broadcast %51 : i32 to vector<8x8xi32>
    %54 = arith.addi %53, %52 : vector<8x8xi32>
    %c8_i32_23 = arith.constant 8 : i32
    %55 = arith.muli %arg1, %c8_i32_23 : i32
    %56 = tpu.iota {dimensions = array<i32: 1>} : vector<8x8xi32>
    %57 = vector.broadcast %55 : i32 to vector<8x8xi32>
    %58 = arith.addi %57, %56 : vector<8x8xi32>
    %59 = arith.cmpi eq, %54, %58 : vector<8x8xi32>
    %cst_24 = arith.constant -1.000000e+30 : f32
    %60 = vector.broadcast %cst_24 : f32 to vector<8x8xf32>
    %61 = arith.select %59, %60, %47 : vector<8x8xi1>, vector<8x8xf32>
    %cst_25 = arith.constant -1.000000e+30 : f32
    %62 = vector.broadcast %cst_25 : f32 to vector<8x8xf32>
    %63 = arith.select %59, %62, %50 : vector<8x8xi1>, vector<8x8xf32>
    %c0_26 = arith.constant 0 : index
    %c0_27 = arith.constant 0 : index
    %64 = vector.load %arg8[%c0_26, %c0_27] : memref<8x1xf32, #tpu.memory_space<vmem>>, vector<8x1xf32>
    %cst_28 = arith.constant dense<0xFF800000> : vector<8xf32>
    %65 = vector.multi_reduction <maximumf>, %61, %cst_28 [1] : vector<8x8xf32> to vector<8xf32>
    %66 = vector.shape_cast %65 : vector<8xf32> to vector<8x1xf32>
    %cst_29 = arith.constant dense<0xFF800000> : vector<8xf32>
    %67 = vector.multi_reduction <maximumf>, %48, %cst_29 [1] : vector<8x8xf32> to vector<8xf32>
    %68 = vector.shape_cast %67 : vector<8xf32> to vector<8x1xf32>
    %69 = arith.maximumf %66, %68 : vector<8x1xf32>
    %70 = arith.maximumf %64, %69 : vector<8x1xf32>
    %71 = arith.subf %64, %70 : vector<8x1xf32>
    %72 = math.exp %71 : vector<8x1xf32>
    %73 = vector.broadcast %70 : vector<8x1xf32> to vector<8x8xf32>
    %74 = arith.subf %61, %73 : vector<8x8xf32>
    %75 = math.exp %74 : vector<8x8xf32>
    %cst_30 = arith.constant dense<0.000000e+00> : vector<8xf32>
    %76 = vector.multi_reduction <add>, %75, %cst_30 [1] : vector<8x8xf32> to vector<8xf32>
    %77 = vector.shape_cast %76 : vector<8xf32> to vector<8x1xf32>
    %78 = vector.broadcast %70 : vector<8x1xf32> to vector<8x8xf32>
    %79 = arith.subf %48, %78 : vector<8x8xf32>
    %80 = math.exp %79 : vector<8x8xf32>
    %cst_31 = arith.constant dense<0.000000e+00> : vector<8xf32>
    %81 = vector.multi_reduction <add>, %80, %cst_31 [1] : vector<8x8xf32> to vector<8xf32>
    %82 = vector.shape_cast %81 : vector<8xf32> to vector<8x1xf32>
    %83 = arith.addf %77, %82 : vector<8x1xf32>
    %c0_32 = arith.constant 0 : index
    %c0_33 = arith.constant 0 : index
    %84 = vector.load %arg9[%c0_32, %c0_33] : memref<8x1xf32, #tpu.memory_space<vmem>>, vector<8x1xf32>
    %85 = arith.mulf %72, %84 : vector<8x1xf32>
    %86 = arith.addf %85, %83 : vector<8x1xf32>
    %c0_34 = arith.constant 0 : index
    %c0_35 = arith.constant 0 : index
    %87 = vector.load %arg9[%c0_34, %c0_35] : memref<8x1xf32, #tpu.memory_space<vmem>>, vector<8x1xf32>
    tpu.vector_store %arg9[%c0_34, %c0_35], %86 {strides = array<i32>} : memref<8x1xf32, #tpu.memory_space<vmem>>, vector<8x1xf32>,
    %c0_36 = arith.constant 0 : index
    %c0_37 = arith.constant 0 : index
    %88 = vector.load %arg8[%c0_36, %c0_37] : memref<8x1xf32, #tpu.memory_space<vmem>>, vector<8x1xf32>
    tpu.vector_store %arg8[%c0_36, %c0_37], %70 {strides = array<i32>} : memref<8x1xf32, #tpu.memory_space<vmem>>, vector<8x1xf32>,
    %c0_38 = arith.constant 0 : index
    %c0_39 = arith.constant 0 : index
    %89 = vector.load %arg10[%c0_38, %c0_39] : memref<8x1xf32, #tpu.memory_space<vmem>>, vector<8x1xf32>
    %cst_40 = arith.constant dense<0xFF800000> : vector<8xf32>
    %90 = vector.multi_reduction <maximumf>, %49, %cst_40 [1] : vector<8x8xf32> to vector<8xf32>
    %91 = vector.shape_cast %90 : vector<8xf32> to vector<8x1xf32>
    %cst_41 = arith.constant dense<0xFF800000> : vector<8xf32>
    %92 = vector.multi_reduction <maximumf>, %63, %cst_41 [1] : vector<8x8xf32> to vector<8xf32>
    %93 = vector.shape_cast %92 : vector<8xf32> to vector<8x1xf32>
    %94 = arith.maximumf %91, %93 : vector<8x1xf32>
    %95 = arith.maximumf %89, %94 : vector<8x1xf32>
    %96 = arith.subf %89, %95 : vector<8x1xf32>
    %97 = math.exp %96 : vector<8x1xf32>
    %98 = vector.broadcast %95 : vector<8x1xf32> to vector<8x8xf32>
    %99 = arith.subf %49, %98 : vector<8x8xf32>
    %100 = math.exp %99 : vector<8x8xf32>
    %cst_42 = arith.constant dense<0.000000e+00> : vector<8xf32>
    %101 = vector.multi_reduction <add>, %100, %cst_42 [1] : vector<8x8xf32> to vector<8xf32>
    %102 = vector.shape_cast %101 : vector<8xf32> to vector<8x1xf32>
    %103 = vector.broadcast %95 : vector<8x1xf32> to vector<8x8xf32>
    %104 = arith.subf %63, %103 : vector<8x8xf32>
    %105 = math.exp %104 : vector<8x8xf32>
    %cst_43 = arith.constant dense<0.000000e+00> : vector<8xf32>
    %106 = vector.multi_reduction <add>, %105, %cst_43 [1] : vector<8x8xf32> to vector<8xf32>
    %107 = vector.shape_cast %106 : vector<8xf32> to vector<8x1xf32>
    %108 = arith.addf %102, %107 : vector<8x1xf32>
    %c0_44 = arith.constant 0 : index
    %c0_45 = arith.constant 0 : index
    %109 = vector.load %arg11[%c0_44, %c0_45] : memref<8x1xf32, #tpu.memory_space<vmem>>, vector<8x1xf32>
    %110 = arith.mulf %97, %109 : vector<8x1xf32>
    %111 = arith.addf %110, %108 : vector<8x1xf32>
    %c0_46 = arith.constant 0 : index
    %c0_47 = arith.constant 0 : index
    %112 = vector.load %arg11[%c0_46, %c0_47] : memref<8x1xf32, #tpu.memory_space<vmem>>, vector<8x1xf32>
    tpu.vector_store %arg11[%c0_46, %c0_47], %111 {strides = array<i32>} : memref<8x1xf32, #tpu.memory_space<vmem>>, vector<8x1xf32>,
    %c0_48 = arith.constant 0 : index
    %c0_49 = arith.constant 0 : index
    %113 = vector.load %arg10[%c0_48, %c0_49] : memref<8x1xf32, #tpu.memory_space<vmem>>, vector<8x1xf32>
    tpu.vector_store %arg10[%c0_48, %c0_49], %95 {strides = array<i32>} : memref<8x1xf32, #tpu.memory_space<vmem>>, vector<8x1xf32>,
    %c0_i32_50 = arith.constant 0 : i32
    %114 = arith.cmpi eq, %arg1, %c0_i32_50 : i32
    %115 = arith.extui %114 : i1 to i32
    %c0_i32_51 = arith.constant 0 : i32
    %116 = arith.cmpi ne, %115, %c0_i32_51 : i32
    scf.if %116 {
      %117 = arith.mulf %13, %24 : vector<8x128xf32>
      %cst_52 = arith.constant dense<0.000000e+00> : vector<8xf32>
      %118 = vector.multi_reduction <add>, %117, %cst_52 [1] : vector<8x128xf32> to vector<8xf32>
      %119 = vector.shape_cast %118 : vector<8xf32> to vector<8x1xf32>
      %cst_53 = arith.constant 14.2857141 : f32
      %120 = vector.broadcast %cst_53 : f32 to vector<8x1xf32>
      %121 = arith.mulf %119, %120 : vector<8x1xf32>
      %c0_54 = arith.constant 0 : index
      %c0_55 = arith.constant 0 : index
      %122 = vector.load %arg8[%c0_54, %c0_55] : memref<8x1xf32, #tpu.memory_space<vmem>>, vector<8x1xf32>
      %c0_56 = arith.constant 0 : index
      %c0_57 = arith.constant 0 : index
      %123 = vector.load %arg9[%c0_56, %c0_57] : memref<8x1xf32, #tpu.memory_space<vmem>>, vector<8x1xf32>
      %124 = math.log %123 : vector<8x1xf32>
      %125 = arith.addf %122, %124 : vector<8x1xf32>
      %126 = arith.subf %125, %121 : vector<8x1xf32>
      %c0_58 = arith.constant 0 : index
      %c0_59 = arith.constant 0 : index
      %127 = vector.load %arg6[%c0_58, %c0_59] : memref<8x1xf32, #tpu.memory_space<vmem>>, vector<8x1xf32>
      tpu.vector_store %arg6[%c0_58, %c0_59], %126 {strides = array<i32>} : memref<8x1xf32, #tpu.memory_space<vmem>>, vector<8x1xf32>,
      %c0_60 = arith.constant 0 : index
      %c0_61 = arith.constant 0 : index
      %128 = vector.load %arg10[%c0_60, %c0_61] : memref<8x1xf32, #tpu.memory_space<vmem>>, vector<8x1xf32>
      %c0_62 = arith.constant 0 : index
      %c0_63 = arith.constant 0 : index
      %129 = vector.load %arg11[%c0_62, %c0_63] : memref<8x1xf32, #tpu.memory_space<vmem>>, vector<8x1xf32>
      %130 = math.log %129 : vector<8x1xf32>
      %131 = arith.addf %128, %130 : vector<8x1xf32>
      %132 = arith.subf %131, %121 : vector<8x1xf32>
      %c0_64 = arith.constant 0 : index
      %c0_65 = arith.constant 0 : index
      %133 = vector.load %arg7[%c0_64, %c0_65] : memref<8x1xf32, #tpu.memory_space<vmem>>, vector<8x1xf32>
      tpu.vector_store %arg7[%c0_64, %c0_65], %132 {strides = array<i32>} : memref<8x1xf32, #tpu.memory_space<vmem>>, vector<8x1xf32>,
    } else {
    }
    return
  }
  func.func @transform_0(%arg0: i32, %arg1: i32) -> (i32, i32) {
    %c0_i32 = arith.constant 0 : i32
    %c0_i32_0 = arith.constant 0 : i32
    return %arg0, %c0_i32 : i32, i32
  }
  func.func @transform_1(%arg0: i32, %arg1: i32) -> (i32, i32) {
    %c0_i32 = arith.constant 0 : i32
    %c0_i32_0 = arith.constant 0 : i32
    return %arg0, %c0_i32 : i32, i32
  }
  func.func @transform_2(%arg0: i32, %arg1: i32) -> (i32, i32) {
    %c0_i32 = arith.constant 0 : i32
    %c0_i32_0 = arith.constant 0 : i32
    return %arg1, %c0_i32 : i32, i32
  }
  func.func @transform_3(%arg0: i32, %arg1: i32) -> (i32, i32) {
    %c0_i32 = arith.constant 0 : i32
    %c0_i32_0 = arith.constant 0 : i32
    return %arg1, %c0_i32 : i32, i32
  }
  func.func @transform_4(%arg0: i32, %arg1: i32) -> (i32, i32) {
    %c0_i32 = arith.constant 0 : i32
    %c0_i32_0 = arith.constant 0 : i32
    return %arg0, %c0_i32 : i32, i32
  }
  func.func @transform_5(%arg0: i32, %arg1: i32) -> (i32, i32) {
    %c0_i32 = arith.constant 0 : i32
    %c0_i32_0 = arith.constant 0 : i32
    return %arg0, %c0_i32 : i32, i32
  }
}

</mosaic_0001>

<llo_original>
// kernel: tpu_custom_call.1
$region0: #{tpu_custom_call.1}
  #allocation0 [shape = 'u32[]', space=smem, size = 0x4, offset = 0x4, fixed_abs, tag = 'smem constant byte address 0x4 - core index']
  #allocation1 [shape = 'u32[144,128]{1,0:T(1,128)}', space=vmem, size = 0x12000, scoped, tag = 'internal scratch']
  #allocation2 [shape = 'f32[8,1]{1,0:T(8,128)}', space=vmem, size = 0x1000, scoped, tag = 'scratch operand']
  #allocation3 [shape = 'f32[8,1]{1,0:T(8,128)}', space=vmem, size = 0x1000, scoped, tag = 'scratch operand']
  #allocation4 [shape = 'f32[8,1]{1,0:T(8,128)}', space=vmem, size = 0x1000, scoped, tag = 'scratch operand']
  #allocation5 [shape = 'f32[8,1]{1,0:T(8,128)}', space=vmem, size = 0x1000, scoped, tag = 'scratch operand']
  %s0 = inlined_call_operand.hbm [shape: f32[8,128], index: 0, kind: input, shape index: {}]
  %s1 = inlined_call_operand.hbm [shape: f32[8,128], index: 1, kind: input, shape index: {}]
  %s2 = inlined_call_operand.hbm [shape: f32[8,128], index: 2, kind: input, shape index: {}]
  %s3 = inlined_call_operand.hbm [shape: f32[8,128], index: 3, kind: input, shape index: {}]
  %s4 = inlined_call_operand.hbm [shape: f32[8,1], index: 4, kind: output, shape index: {0}]
  %s5 = inlined_call_operand.hbm [shape: f32[8,1], index: 5, kind: output, shape index: {1}]
  %6 = xla_tuple %s4, %s5
  %s7 = sld [smem:[#allocation0]]
  $region58: #{tpu_custom_call.1} parent=0
    _
  %s9 = ssub.s32 1, %s7
  %s10 = scalar_select 0, %s9, %s7
  $region1: #{tpu_custom_call.1} parent=0
    #allocation6 [shape = 'u8[4096]{0}', space=vmem, size = 0x1000, scoped, tag = 'input window, operand 0, single buffered']
    #allocation7 [shape = 's32[1]{0}', space=sflag, size = 0x4, scoped, tag = 'scoped memory for tpu_custom_call.1']
    #allocation8 [shape = 's32[1]{0}', space=sflag, size = 0x4, scoped, tag = 'scoped memory for tpu_custom_call.1']
    #allocation9 [shape = 'u8[4096]{0}', space=vmem, size = 0x1000, scoped, tag = 'input window, operand 1, single buffered']
    #allocation10 [shape = 's32[1]{0}', space=sflag, size = 0x4, scoped, tag = 'scoped memory for tpu_custom_call.1']
    #allocation11 [shape = 'u8[4096]{0}', space=vmem, size = 0x1000, scoped, tag = 'input window, operand 2, single buffered']
    #allocation12 [shape = 'u8[4096]{0}', space=vmem, size = 0x1000, scoped, tag = 'input window, operand 3, single buffered']
    #allocation13 [shape = 's32[1]{0}', space=sflag, size = 0x4, scoped, tag = 'scoped memory for tpu_custom_call.1']
    #allocation14 [shape = 'u8[4096]{0}', space=vmem, size = 0x1000, scoped, tag = 'output window, operand 0, single buffered']
    #allocation15 [shape = 'u8[4096]{0}', space=vmem, size = 0x1000, scoped, tag = 'output window, operand 1, single buffered']
    #allocation16 [shape = 's32[1]{0}', space=sflag, size = 0x4, scoped, tag = 'scoped memory for tpu_custom_call.1']
    %11 = vsyncpa [#allocation7], 0
    %12 = vsyncpa [#allocation10], 0
    %13 = vsyncpa [#allocation13], 0
    %14 = vsyncpa [#allocation8], 0
    %15 = vsyncpa [#allocation16], 0
    // Predicated region
    $region2: #{tpu_custom_call.1} parent=1 // pred_check
      _
    $region3: #{tpu_custom_call.1} parent=1 // pred_check_branch
      %17 = sbr.rel (0) target = $region5
    $region4: #{tpu_custom_call.1} parent=1 // pred_region
      %s19 = ssub.s32 128, 128
      %20 = vsyncadd [#allocation7], %s19
      %s22 = sshll.u32 [#allocation6], 4
      %s23 = int_to_ptr.vmem [resolvable:$true] %s22
      %25 = dma.hbm_to_vmem [thread:$0]  %s0, 128, %s23, [#allocation7]
    $region5: #{tpu_custom_call.1} parent=1 // pred_fallthru
      _
    // Predicated region
    $region6: #{tpu_custom_call.1} parent=1 // pred_check
      _
    $region7: #{tpu_custom_call.1} parent=1 // pred_check_branch
      %27 = sbr.rel (0) target = $region9
    $region8: #{tpu_custom_call.1} parent=1 // pred_region
      %s29 = ssub.s32 128, 128
      %30 = vsyncadd [#allocation10], %s29
      %s32 = sshll.u32 [#allocation9], 4
      %s33 = int_to_ptr.vmem [resolvable:$true] %s32
      %35 = dma.hbm_to_vmem [thread:$0]  %s1, 128, %s33, [#allocation10]
    $region9: #{tpu_custom_call.1} parent=1 // pred_fallthru
      _
    // Predicated region
    $region10: #{tpu_custom_call.1} parent=1 // pred_check
      _
    $region11: #{tpu_custom_call.1} parent=1 // pred_check_branch
      %37 = sbr.rel (0) target = $region13
    $region12: #{tpu_custom_call.1} parent=1 // pred_region
      %s39 = ssub.s32 128, 128
      %40 = vsyncadd [#allocation10], %s39
      %s42 = sshll.u32 [#allocation11], 4
      %s43 = int_to_ptr.vmem [resolvable:$true] %s42
      %45 = dma.hbm_to_vmem [thread:$0]  %s2, 128, %s43, [#allocation10]
    $region13: #{tpu_custom_call.1} parent=1 // pred_fallthru
      _
    // Predicated region
    $region14: #{tpu_custom_call.1} parent=1 // pred_check
      _
    $region15: #{tpu_custom_call.1} parent=1 // pred_check_branch
      %47 = sbr.rel (0) target = $region17
    $region16: #{tpu_custom_call.1} parent=1 // pred_region
      %s49 = ssub.s32 128, 128
      %50 = vsyncadd [#allocation13], %s49
      %s52 = sshll.u32 [#allocation12], 4
      %s53 = int_to_ptr.vmem [resolvable:$true] %s52
      %55 = dma.hbm_to_vmem [thread:$0]  %s3, 128, %s53, [#allocation13]
    $region17: #{tpu_custom_call.1} parent=1 // pred_fallthru
      _
    // Predicated region
    $region18: #{tpu_custom_call.1} parent=1 // pred_check
      _
    $region19: #{tpu_custom_call.1} parent=1 // pred_check_branch
      %57 = sbr.rel (0) target = $region21
    $region20: #{tpu_custom_call.1} parent=1 // pred_region
      %58 = dma.done [#allocation7], 128
    $region21: #{tpu_custom_call.1} parent=1 // pred_fallthru
      _
    // Predicated region
    $region22: #{tpu_custom_call.1} parent=1 // pred_check
      _
    $region23: #{tpu_custom_call.1} parent=1 // pred_check_branch
      %60 = sbr.rel (0) target = $region25
    $region24: #{tpu_custom_call.1} parent=1 // pred_region
      %61 = dma.done [#allocation10], 128
    $region25: #{tpu_custom_call.1} parent=1 // pred_fallthru
      _
    // Predicated region
    $region26: #{tpu_custom_call.1} parent=1 // pred_check
      _
    $region27: #{tpu_custom_call.1} parent=1 // pred_check_branch
      %63 = sbr.rel (0) target = $region29
    $region28: #{tpu_custom_call.1} parent=1 // pred_region
      %64 = dma.done [#allocation10], 128
    $region29: #{tpu_custom_call.1} parent=1 // pred_fallthru
      _
    // Predicated region
    $region30: #{tpu_custom_call.1} parent=1 // pred_check
      _
    $region31: #{tpu_custom_call.1} parent=1 // pred_check_branch
      %66 = sbr.rel (0) target = $region33
    $region32: #{tpu_custom_call.1} parent=1 // pred_region
      %67 = dma.done [#allocation13], 128
    $region33: #{tpu_custom_call.1} parent=1 // pred_fallthru
      _
    %p68 = scmp.eq.s32.totalorder 0, 0
    // Predicated region
    $region34: #{tpu_custom_call.1} parent=1 // pred_check
      %p69 = pneg %p68
    $region35: #{tpu_custom_call.1} parent=1 // pred_check_branch
      %71 = sbr.rel (%p69) target = $region37
    $region36: #{tpu_custom_call.1} parent=1 // pred_region
      %vm72 = vcmask 7168
      %73 = vst.msk [vmem:[#allocation2] sm:$0xff] %vm72, -inf
      %74 = vst.msk [vmem:[#allocation4] sm:$0xff] %vm72, -inf
      %75 = vst.msk [vmem:[#allocation3] sm:$0xff] %vm72, 0.0
      %76 = vst.msk [vmem:[#allocation5] sm:$0xff] %vm72, 0.0
    $region37: #{tpu_custom_call.1} parent=1 // pred_fallthru
      _
    %v77 = vld [vmem:[#allocation6] sm:$0xff]
    %v78 = vmul.f32 %v77, %v77
    %79 = vadd.xlane.f32.xlu0 %v78
    %v80 = vpop.xlane.xlu0 %79
    %v81 = vmax.f32 %v80, 1e-24
    %v82 = vrsqrt.pop %v81
    %v83 = vmul.f32 %v77, %v82
    %v84 = vld [vmem:[#allocation9] sm:$0xff]
    %v85 = vmul.f32 %v84, %v84
    %86 = vadd.xlane.f32.xlu0 %v85
    %v87 = vpop.xlane.xlu0 %86
    %v88 = vmax.f32 %v87, 1e-24
    %v89 = vrsqrt.pop %v88
    %v90 = vmul.f32 %v84, %v89
    %v91 = vld [vmem:[#allocation11] sm:$0xff]
    %v92 = vmul.f32 %v91, %v91
    %93 = vadd.xlane.f32.xlu0 %v92
    %v94 = vpop.xlane.xlu0 %93
    %v95 = vmax.f32 %v94, 1e-24
    %v96 = vrsqrt.pop %v95
    %v97 = vmul.f32 %v96, 14.285714
    %v98 = vmul.f32 %v91, %v97
    %v99 = vld [vmem:[#allocation12] sm:$0xff]
    %v100 = vmul.f32 %v99, %v99
    %101 = vadd.xlane.f32.xlu0 %v100
    %v102 = vpop.xlane.xlu0 %101
    %v103 = vmax.f32 %v102, 1e-24
    %v104 = vrsqrt.pop %v103
    %v105 = vmul.f32 %v104, 14.285714
    %v106 = vmul.f32 %v99, %v105
    %107 = vmatprep.subr.mxu0 0.0
    %108 = vmatpush1.xpose.msra.mxu0 %v98
    %109 = vmatprep.subr.mxu0 0.0
    %110 = vmatpush1.xpose.msra.mxu0 0.0
    %111 = vmatprep.subr.mxu0 0.0
    %112 = vmatpush1.xpose.msra.mxu0 0.0
    %113 = vmatprep.subr.mxu0 0.0
    %114 = vmatpush1.xpose.msra.mxu0 0.0
    %115 = vmatprep.subr.mxu0 0.0
    %116 = vmatpush1.xpose.msra.mxu0 0.0
    %117 = vmatprep.subr.mxu0 0.0
    %118 = vmatpush1.xpose.msra.mxu0 0.0
    %119 = vmatprep.subr.mxu0 0.0
    %120 = vmatpush1.xpose.msra.mxu0 0.0
    %121 = vmatprep.subr.mxu0 0.0
    %122 = vmatpush1.xpose.msra.mxu0 0.0
    %123 = vmatprep.subr.mxu0 0.0
    %124 = vmatpush1.xpose.msra.mxu0 0.0
    %125 = vmatprep.subr.mxu0 0.0
    %126 = vmatpush1.xpose.msra.mxu0 0.0
    %127 = vmatprep.subr.mxu0 0.0
    %128 = vmatpush1.xpose.msra.mxu0 0.0
    %129 = vmatprep.subr.mxu0 0.0
    %130 = vmatpush1.xpose.msra.mxu0 0.0
    %131 = vmatprep.subr.mxu0 0.0
    %132 = vmatpush1.xpose.msra.mxu0 0.0
    %133 = vmatprep.subr.mxu0 0.0
    %134 = vmatpush1.xpose.msra.mxu0 0.0
    %135 = vmatprep.subr.mxu0 0.0
    %136 = vmatpush1.xpose.msra.mxu0 0.0
    %137 = vmatprep.subr.mxu0 0.0
    %138 = vmatpush1.xpose.msra.mxu0 0.0
    %139 = vmatprep.subr.mxu0 0.0
    %140 = vmatpush1.xpose.msra.mxu0 0.0
    %141 = vmatprep.subr.mxu0 0.0
    %142 = vmatpush1.xpose.msra.mxu0 0.0
    %143 = vmatprep.subr.mxu0 0.0
    %144 = vmatpush1.xpose.msra.mxu0 0.0
    %145 = vmatprep.subr.mxu0 0.0
    %146 = vmatpush1.xpose.msra.mxu0 0.0
    %147 = vmatprep.subr.mxu0 0.0
    %148 = vmatpush1.xpose.msra.mxu0 0.0
    %149 = vmatprep.subr.mxu0 0.0
    %150 = vmatpush1.xpose.msra.mxu0 0.0
    %151 = vmatprep.subr.mxu0 0.0
    %152 = vmatpush1.xpose.msra.mxu0 0.0
    %153 = vmatprep.subr.mxu0 0.0
    %154 = vmatpush1.xpose.msra.mxu0 0.0
    %155 = vmatprep.subr.mxu0 0.0
    %156 = vmatpush1.xpose.msra.mxu0 0.0
    %157 = vmatprep.subr.mxu0 0.0
    %158 = vmatpush1.xpose.msra.mxu0 0.0
    %159 = vmatprep.subr.mxu0 0.0
    %160 = vmatpush1.xpose.msra.mxu0 0.0
    %161 = vmatprep.subr.mxu0 0.0
    %162 = vmatpush1.xpose.msra.mxu0 0.0
    %163 = vmatprep.subr.mxu0 0.0
    %164 = vmatpush1.xpose.msra.mxu0 0.0
    %165 = vmatprep.subr.mxu0 0.0
    %166 = vmatpush1.xpose.msra.mxu0 0.0
    %167 = vmatprep.subr.mxu0 0.0
    %168 = vmatpush1.xpose.msra.mxu0 0.0
    %169 = vmatprep.subr.mxu0 0.0
    %170 = vmatpush1.xpose.msra.mxu0 0.0
    %171 = vmatprep.mubr.f32.mxu0 0.0
    %172 = vmatmul.mubr.f32.gmra.mrb[0].mxu0 %v83
    %v173 = vpop.f32.mrb[0].mxu0
    %v174 = vadd.f32 0.0, %v173
    %v175 = vpop.f32.mrb[0].mxu0
    %176 = vdwg.mxu0
    %177 = vmatprep.subr.mxu0 0.0
    %178 = vmatpush1.xpose.msra.mxu0 %v106
    %179 = vmatprep.subr.mxu0 0.0
    %180 = vmatpush1.xpose.msra.mxu0 0.0
    %181 = vmatprep.subr.mxu0 0.0
    %182 = vmatpush1.xpose.msra.mxu0 0.0
    %183 = vmatprep.subr.mxu0 0.0
    %184 = vmatpush1.xpose.msra.mxu0 0.0
    %185 = vmatprep.subr.mxu0 0.0
    %186 = vmatpush1.xpose.msra.mxu0 0.0
    %187 = vmatprep.subr.mxu0 0.0
    %188 = vmatpush1.xpose.msra.mxu0 0.0
    %189 = vmatprep.subr.mxu0 0.0
    %190 = vmatpush1.xpose.msra.mxu0 0.0
    %191 = vmatprep.subr.mxu0 0.0
    %192 = vmatpush1.xpose.msra.mxu0 0.0
    %193 = vmatprep.subr.mxu0 0.0
    %194 = vmatpush1.xpose.msra.mxu0 0.0
    %195 = vmatprep.subr.mxu0 0.0
    %196 = vmatpush1.xpose.msra.mxu0 0.0
    %197 = vmatprep.subr.mxu0 0.0
    %198 = vmatpush1.xpose.msra.mxu0 0.0
    %199 = vmatprep.subr.mxu0 0.0
    %200 = vmatpush1.xpose.msra.mxu0 0.0
    %201 = vmatprep.subr.mxu0 0.0
    %202 = vmatpush1.xpose.msra.mxu0 0.0
    %203 = vmatprep.subr.mxu0 0.0
    %204 = vmatpush1.xpose.msra.mxu0 0.0
    %205 = vmatprep.subr.mxu0 0.0
    %206 = vmatpush1.xpose.msra.mxu0 0.0
    %207 = vmatprep.subr.mxu0 0.0
    %208 = vmatpush1.xpose.msra.mxu0 0.0
    %209 = vmatprep.subr.mxu0 0.0
    %210 = vmatpush1.xpose.msra.mxu0 0.0
    %211 = vmatprep.subr.mxu0 0.0
    %212 = vmatpush1.xpose.msra.mxu0 0.0
    %213 = vmatprep.subr.mxu0 0.0
    %214 = vmatpush1.xpose.msra.mxu0 0.0
    %215 = vmatprep.subr.mxu0 0.0
    %216 = vmatpush1.xpose.msra.mxu0 0.0
    %217 = vmatprep.subr.mxu0 0.0
    %218 = vmatpush1.xpose.msra.mxu0 0.0
    %219 = vmatprep.subr.mxu0 0.0
    %220 = vmatpush1.xpose.msra.mxu0 0.0
    %221 = vmatprep.subr.mxu0 0.0
    %222 = vmatpush1.xpose.msra.mxu0 0.0
    %223 = vmatprep.subr.mxu0 0.0
    %224 = vmatpush1.xpose.msra.mxu0 0.0
    %225 = vmatprep.subr.mxu0 0.0
    %226 = vmatpush1.xpose.msra.mxu0 0.0
    %227 = vmatprep.subr.mxu0 0.0
    %228 = vmatpush1.xpose.msra.mxu0 0.0
    %229 = vmatprep.subr.mxu0 0.0
    %230 = vmatpush1.xpose.msra.mxu0 0.0
    %231 = vmatprep.subr.mxu0 0.0
    %232 = vmatpush1.xpose.msra.mxu0 0.0
    %233 = vmatprep.subr.mxu0 0.0
    %234 = vmatpush1.xpose.msra.mxu0 0.0
    %235 = vmatprep.subr.mxu0 0.0
    %236 = vmatpush1.xpose.msra.mxu0 0.0
    %237 = vmatprep.subr.mxu0 0.0
    %238 = vmatpush1.xpose.msra.mxu0 0.0
    %239 = vmatprep.subr.mxu0 0.0
    %240 = vmatpush1.xpose.msra.mxu0 0.0
    %241 = vmatprep.mubr.f32.mxu0 0.0
    %242 = vmatmul.mubr.f32.gmra.mrb[0].mxu0 %v83
    %v243 = vpop.f32.mrb[0].mxu0
    %v244 = vadd.f32 0.0, %v243
    %v245 = vpop.f32.mrb[0].mxu0
    %246 = vdwg.mxu0
    %247 = vmatprep.subr.mxu0 0.0
    %248 = vmatpush1.xpose.msra.mxu0 %v98
    %249 = vmatprep.subr.mxu0 0.0
    %250 = vmatpush1.xpose.msra.mxu0 0.0
    %251 = vmatprep.subr.mxu0 0.0
    %252 = vmatpush1.xpose.msra.mxu0 0.0
    %253 = vmatprep.subr.mxu0 0.0
    %254 = vmatpush1.xpose.msra.mxu0 0.0
    %255 = vmatprep.subr.mxu0 0.0
    %256 = vmatpush1.xpose.msra.mxu0 0.0
    %257 = vmatprep.subr.mxu0 0.0
    %258 = vmatpush1.xpose.msra.mxu0 0.0
    %259 = vmatprep.subr.mxu0 0.0
    %260 = vmatpush1.xpose.msra.mxu0 0.0
    %261 = vmatprep.subr.mxu0 0.0
    %262 = vmatpush1.xpose.msra.mxu0 0.0
    %263 = vmatprep.subr.mxu0 0.0
    %264 = vmatpush1.xpose.msra.mxu0 0.0
    %265 = vmatprep.subr.mxu0 0.0
    %266 = vmatpush1.xpose.msra.mxu0 0.0
    %267 = vmatprep.subr.mxu0 0.0
    %268 = vmatpush1.xpose.msra.mxu0 0.0
    %269 = vmatprep.subr.mxu0 0.0
    %270 = vmatpush1.xpose.msra.mxu0 0.0
    %271 = vmatprep.subr.mxu0 0.0
    %272 = vmatpush1.xpose.msra.mxu0 0.0
    %273 = vmatprep.subr.mxu0 0.0
    %274 = vmatpush1.xpose.msra.mxu0 0.0
    %275 = vmatprep.subr.mxu0 0.0
    %276 = vmatpush1.xpose.msra.mxu0 0.0
    %277 = vmatprep.subr.mxu0 0.0
    %278 = vmatpush1.xpose.msra.mxu0 0.0
    %279 = vmatprep.subr.mxu0 0.0
    %280 = vmatpush1.xpose.msra.mxu0 0.0
    %281 = vmatprep.subr.mxu0 0.0
    %282 = vmatpush1.xpose.msra.mxu0 0.0
    %283 = vmatprep.subr.mxu0 0.0
    %284 = vmatpush1.xpose.msra.mxu0 0.0
    %285 = vmatprep.subr.mxu0 0.0
    %286 = vmatpush1.xpose.msra.mxu0 0.0
    %287 = vmatprep.subr.mxu0 0.0
    %288 = vmatpush1.xpose.msra.mxu0 0.0
    %289 = vmatprep.subr.mxu0 0.0
    %290 = vmatpush1.xpose.msra.mxu0 0.0
    %291 = vmatprep.subr.mxu0 0.0
    %292 = vmatpush1.xpose.msra.mxu0 0.0
    %293 = vmatprep.subr.mxu0 0.0
    %294 = vmatpush1.xpose.msra.mxu0 0.0
    %295 = vmatprep.subr.mxu0 0.0
    %296 = vmatpush1.xpose.msra.mxu0 0.0
    %297 = vmatprep.subr.mxu0 0.0
    %298 = vmatpush1.xpose.msra.mxu0 0.0
    %299 = vmatprep.subr.mxu0 0.0
    %300 = vmatpush1.xpose.msra.mxu0 0.0
    %301 = vmatprep.subr.mxu0 0.0
    %302 = vmatpush1.xpose.msra.mxu0 0.0
    %303 = vmatprep.subr.mxu0 0.0
    %304 = vmatpush1.xpose.msra.mxu0 0.0
    %305 = vmatprep.subr.mxu0 0.0
    %306 = vmatpush1.xpose.msra.mxu0 0.0
    %307 = vmatprep.subr.mxu0 0.0
    %308 = vmatpush1.xpose.msra.mxu0 0.0
    %309 = vmatprep.subr.mxu0 0.0
    %310 = vmatpush1.xpose.msra.mxu0 0.0
    %311 = vmatprep.mubr.f32.mxu0 0.0
    %312 = vmatmul.mubr.f32.gmra.mrb[0].mxu0 %v90
    %v313 = vpop.f32.mrb[0].mxu0
    %v314 = vadd.f32 0.0, %v313
    %v315 = vpop.f32.mrb[0].mxu0
    %316 = vdwg.mxu0
    %317 = vmatprep.subr.mxu0 0.0
    %318 = vmatpush1.xpose.msra.mxu0 %v106
    %319 = vmatprep.subr.mxu0 0.0
    %320 = vmatpush1.xpose.msra.mxu0 0.0
    %321 = vmatprep.subr.mxu0 0.0
    %322 = vmatpush1.xpose.msra.mxu0 0.0
    %323 = vmatprep.subr.mxu0 0.0
    %324 = vmatpush1.xpose.msra.mxu0 0.0
    %325 = vmatprep.subr.mxu0 0.0
    %326 = vmatpush1.xpose.msra.mxu0 0.0
    %327 = vmatprep.subr.mxu0 0.0
    %328 = vmatpush1.xpose.msra.mxu0 0.0
    %329 = vmatprep.subr.mxu0 0.0
    %330 = vmatpush1.xpose.msra.mxu0 0.0
    %331 = vmatprep.subr.mxu0 0.0
    %332 = vmatpush1.xpose.msra.mxu0 0.0
    %333 = vmatprep.subr.mxu0 0.0
    %334 = vmatpush1.xpose.msra.mxu0 0.0
    %335 = vmatprep.subr.mxu0 0.0
    %336 = vmatpush1.xpose.msra.mxu0 0.0
    %337 = vmatprep.subr.mxu0 0.0
    %338 = vmatpush1.xpose.msra.mxu0 0.0
    %339 = vmatprep.subr.mxu0 0.0
    %340 = vmatpush1.xpose.msra.mxu0 0.0
    %341 = vmatprep.subr.mxu0 0.0
    %342 = vmatpush1.xpose.msra.mxu0 0.0
    %343 = vmatprep.subr.mxu0 0.0
    %344 = vmatpush1.xpose.msra.mxu0 0.0
    %345 = vmatprep.subr.mxu0 0.0
    %346 = vmatpush1.xpose.msra.mxu0 0.0
    %347 = vmatprep.subr.mxu0 0.0
    %348 = vmatpush1.xpose.msra.mxu0 0.0
    %349 = vmatprep.subr.mxu0 0.0
    %350 = vmatpush1.xpose.msra.mxu0 0.0
    %351 = vmatprep.subr.mxu0 0.0
    %352 = vmatpush1.xpose.msra.mxu0 0.0
    %353 = vmatprep.subr.mxu0 0.0
    %354 = vmatpush1.xpose.msra.mxu0 0.0
    %355 = vmatprep.subr.mxu0 0.0
    %356 = vmatpush1.xpose.msra.mxu0 0.0
    %357 = vmatprep.subr.mxu0 0.0
    %358 = vmatpush1.xpose.msra.mxu0 0.0
    %359 = vmatprep.subr.mxu0 0.0
    %360 = vmatpush1.xpose.msra.mxu0 0.0
    %361 = vmatprep.subr.mxu0 0.0
    %362 = vmatpush1.xpose.msra.mxu0 0.0
    %363 = vmatprep.subr.mxu0 0.0
    %364 = vmatpush1.xpose.msra.mxu0 0.0
    %365 = vmatprep.subr.mxu0 0.0
    %366 = vmatpush1.xpose.msra.mxu0 0.0
    %367 = vmatprep.subr.mxu0 0.0
    %368 = vmatpush1.xpose.msra.mxu0 0.0
    %369 = vmatprep.subr.mxu0 0.0
    %370 = vmatpush1.xpose.msra.mxu0 0.0
    %371 = vmatprep.subr.mxu0 0.0
    %372 = vmatpush1.xpose.msra.mxu0 0.0
    %373 = vmatprep.subr.mxu0 0.0
    %374 = vmatpush1.xpose.msra.mxu0 0.0
    %375 = vmatprep.subr.mxu0 0.0
    %376 = vmatpush1.xpose.msra.mxu0 0.0
    %377 = vmatprep.subr.mxu0 0.0
    %378 = vmatpush1.xpose.msra.mxu0 0.0
    %379 = vmatprep.subr.mxu0 0.0
    %380 = vmatpush1.xpose.msra.mxu0 0.0
    %381 = vmatprep.mubr.f32.mxu0 0.0
    %382 = vmatmul.mubr.f32.gmra.mrb[0].mxu0 %v90
    %v383 = vpop.f32.mrb[0].mxu0
    %v384 = vadd.f32 0.0, %v383
    %v385 = vpop.f32.mrb[0].mxu0
    %386 = vdwg.mxu0
    %s387 = smul.u32 0, 8
    %v388 = vlaneseq
    %v389 = vshrl.u32 %v388, 7
    %v390 = vstv %s387
    %v391 = vadd.s32 %v390, %v389
    %s392 = smul.u32 0, 8
    %v393 = vlaneseq
    %v394 = vand.u32 %v393, 127
    %v395 = vstv %s392
    %v396 = vadd.s32 %v395, %v394
    %vm397 = vcmp.eq.s32.totalorder %v391, %v396
    %v398 = vsel %vm397, -1e+30, %v174
    %v399 = vsel %vm397, -1e+30, %v384
    %v400 = vld [vmem:[#allocation2] sm:$0xff]
    %vm401 = vcmask 64512
    %v402 = vsel %vm401, %v398, -inf
    %403 = vmax.xlane.f32.xlu0 %v402
    %v404 = vpop.xlane.xlu0 %403
    %v405 = vsel %vm401, %v244, -inf
    %406 = vmax.xlane.f32.xlu0 %v405
    %v407 = vpop.xlane.xlu0 %406
    %v408 = vmax.f32 %v404, %v407
    %v409 = vmax.f32 %v400, %v408
    %v410 = vsub.f32 %v400, %v409
    %v411 = vmul.f32 %v410, 1.442695
    %v412 = vpow.pop %v411
    %414 = vset.pattern.permute.xlu0 0
    %415 = vperm.xlu0 %414, %v409
    %v416 = vpop.permute.xlu0 %415
    %v418 = vsub.f32 %v398, %v416
    %v419 = vmul.f32 %v418, 1.442695
    %v420 = vpow.pop %v419
    %v421 = vsel %vm401, %v420, 0.0
    %422 = vadd.xlane.f32.xlu0 %v421
    %v423 = vpop.xlane.xlu0 %422
    %v424 = vsub.f32 %v244, %v416
    %v425 = vmul.f32 %v424, 1.442695
    %v426 = vpow.pop %v425
    %v427 = vsel %vm401, %v426, 0.0
    %428 = vadd.xlane.f32.xlu0 %v427
    %v429 = vpop.xlane.xlu0 %428
    %v430 = vadd.f32 %v423, %v429
    %v431 = vld [vmem:[#allocation3] sm:$0xff]
    %v432 = vmul.f32 %v412, %v431
    %v433 = vadd.f32 %v432, %v430
    %vm434 = vcmask 7168
    %435 = vst.msk [vmem:[#allocation3] sm:$0xff] %vm434, %v433
    %436 = vst.msk [vmem:[#allocation2] sm:$0xff] %vm434, %v409
    %v437 = vld [vmem:[#allocation4] sm:$0xff]
    %v438 = vsel %vm401, %v314, -inf
    %439 = vmax.xlane.f32.xlu0 %v438
    %v440 = vpop.xlane.xlu0 %439
    %v441 = vsel %vm401, %v399, -inf
    %442 = vmax.xlane.f32.xlu0 %v441
    %v443 = vpop.xlane.xlu0 %442
    %v444 = vmax.f32 %v440, %v443
    %v445 = vmax.f32 %v437, %v444
    %v446 = vsub.f32 %v437, %v445
    %v447 = vmul.f32 %v446, 1.442695
    %v448 = vpow.pop %v447
    %450 = vset.pattern.permute.xlu0 0
    %451 = vperm.xlu0 %450, %v445
    %v452 = vpop.permute.xlu0 %451
    %v454 = vsub.f32 %v314, %v452
    %v455 = vmul.f32 %v454, 1.442695
    %v456 = vpow.pop %v455
    %v457 = vsel %vm401, %v456, 0.0
    %458 = vadd.xlane.f32.xlu0 %v457
    %v459 = vpop.xlane.xlu0 %458
    %v460 = vsub.f32 %v399, %v452
    %v461 = vmul.f32 %v460, 1.442695
    %v462 = vpow.pop %v461
    %v463 = vsel %vm401, %v462, 0.0
    %464 = vadd.xlane.f32.xlu0 %v463
    %v465 = vpop.xlane.xlu0 %464
    %v466 = vadd.f32 %v459, %v465
    %v467 = vld [vmem:[#allocation5] sm:$0xff]
    %v468 = vmul.f32 %v448, %v467
    %v469 = vadd.f32 %v468, %v466
    %470 = vst.msk [vmem:[#allocation5] sm:$0xff] %vm434, %v469
    %471 = vst.msk [vmem:[#allocation4] sm:$0xff] %vm434, %v445
    // Predicated region
    $region38: #{tpu_custom_call.1} parent=1 // pred_check
      %p472 = pneg %p68
    $region39: #{tpu_custom_call.1} parent=1 // pred_check_branch
      %474 = sbr.rel (%p472) target = $region41
    $region40: #{tpu_custom_call.1} parent=1 // pred_region
      %v475 = vmul.f32 %v83, %v90
      %476 = vadd.xlane.f32.xlu0 %v475
      %v477 = vpop.xlane.xlu0 %476
      %v478 = vmul.f32 %v477, 14.285714
      %v479 = vld [vmem:[#allocation2] sm:$0xff]
      %v480 = vld [vmem:[#allocation3] sm:$0xff]
      %v481 = vlog2.pop %v480
      %v482 = vmul.f32 %v481, 0.6931472
      %v483 = vadd.f32 %v479, %v482
      %v484 = vsub.f32 %v483, %v478
      %485 = vst.msk [vmem:[#allocation14] sm:$0xff] %vm434, %v484
      %v486 = vld [vmem:[#allocation4] sm:$0xff]
      %v487 = vld [vmem:[#allocation5] sm:$0xff]
      %v488 = vlog2.pop %v487
      %v489 = vmul.f32 %v488, 0.6931472
      %v490 = vadd.f32 %v486, %v489
      %v491 = vsub.f32 %v490, %v478
      %492 = vst.msk [vmem:[#allocation15] sm:$0xff] %vm434, %v491
    $region41: #{tpu_custom_call.1} parent=1 // pred_fallthru
      _
    // Predicated region
    $region42: #{tpu_custom_call.1} parent=1 // pred_check
      _
    $region43: #{tpu_custom_call.1} parent=1 // pred_check_branch
      %494 = sbr.rel (0) target = $region45
    $region44: #{tpu_custom_call.1} parent=1 // pred_region
      %s496 = ssub.s32 128, 128
      %497 = vsyncadd [#allocation8], %s496
      %s499 = sshll.u32 [#allocation14], 4
      %s500 = int_to_ptr.vmem [resolvable:$true] %s499
      %502 = dma.vmem_to_hbm [thread:$0]  %s500, 128, %s4, [#allocation8]
    $region45: #{tpu_custom_call.1} parent=1 // pred_fallthru
      _
    // Predicated region
    $region46: #{tpu_custom_call.1} parent=1 // pred_check
      _
    $region47: #{tpu_custom_call.1} parent=1 // pred_check_branch
      %504 = sbr.rel (0) target = $region49
    $region48: #{tpu_custom_call.1} parent=1 // pred_region
      %s506 = ssub.s32 128, 128
      %507 = vsyncadd [#allocation16], %s506
      %s509 = sshll.u32 [#allocation15], 4
      %s510 = int_to_ptr.vmem [resolvable:$true] %s509
      %512 = dma.vmem_to_hbm [thread:$0]  %s510, 128, %s5, [#allocation16]
    $region49: #{tpu_custom_call.1} parent=1 // pred_fallthru
      _
    // Predicated region
    $region50: #{tpu_custom_call.1} parent=1 // pred_check
      _
    $region51: #{tpu_custom_call.1} parent=1 // pred_check_branch
      %514 = sbr.rel (0) target = $region53
    $region52: #{tpu_custom_call.1} parent=1 // pred_region
      %515 = dma.done [#allocation8], 128
    $region53: #{tpu_custom_call.1} parent=1 // pred_fallthru
      _
    // Predicated region
    $region54: #{tpu_custom_call.1} parent=1 // pred_check
      _
    $region55: #{tpu_custom_call.1} parent=1 // pred_check_branch
      %517 = sbr.rel (0) target = $region57
    $region56: #{tpu_custom_call.1} parent=1 // pred_region
      %518 = dma.done [#allocation16], 128
    $region57: #{tpu_custom_call.1} parent=1 // pred_fallthru
      _
    %519 = vsyncpa [#allocation7], 1
    %520 = vsyncpa [#allocation10], 1
    %521 = vsyncpa [#allocation13], 1
    %522 = vsyncpa [#allocation8], 1
    %523 = vsyncpa [#allocation16], 1

</llo_original>
